<compile_context>
chip_gen: v7x
topology: tpu7x:2x2x1
jax: 0.10.0
libtpu: 0.0.40
codegen_flags: <defaults>
</compile_context>

<pallas_src>
import jax
import jax.numpy as jnp
from jax.experimental import pallas as pl
from jax.experimental.pallas import tpu as pltpu

H1 = 128          # fc1 output width
H2 = 64           # fc2 output width
OUT_ROWS = 8      # fc3 logits padded to 8 sublanes -> lane-dense (8, TB) output slab


def _round_up(n, m):
    return ((n + m - 1) // m) * m


def _vmem_capacity_bytes():
    try:
        return pltpu.get_tpu_info().vmem_capacity_bytes
    except Exception:  # pragma: no cover - conservative default (v7x: 64 MiB / TC)
        return 64 << 20


# ---------------------------------------------------------------------------
# Kernels
# ---------------------------------------------------------------------------
def _mlp_head(h1, w2_ref, b2_ref, w3t_ref, b3_ref):
    """relu(fc2(h1)) -> fc3 (transposed, lane-dense) -> sigmoid.  Returns (OUT_ROWS, TB) f32."""
    h2 = jnp.dot(h1.astype(jnp.bfloat16), w2_ref[...],
                 preferred_element_type=jnp.float32)
    h2 = jnp.maximum(h2 + b2_ref[...], 0.0)
    # dropout: identity in eval mode.
    # fc3 as (OUT_ROWS, H2) x (TB, H2)^T so logits come out lane-dense along the
    # batch: the HBM store is 32 B/row instead of a zero-padded 512 B/row.
    zt = jax.lax.dot_general(
        w3t_ref[...], h2.astype(jnp.bfloat16),
        dimension_numbers=(((1,), (1,)), ((), ())),
        preferred_element_type=jnp.float32)
    zt = zt + b3_ref[...]
    return 1.0 / (1.0 + jnp.exp(-zt))        # exact sigmoid (HBM-bound; exp is negligible)


def _mlp_kernel_resident(x_ref, w1_ref, b1_ref, w2_ref, b2_ref, w3t_ref, b3_ref,
                         o_ref):
    """Whole w1 is VMEM-resident; grid is batch-only."""
    xb = x_ref[...].astype(jnp.bfloat16)      # in-kernel cast; x streams f32 from HBM once
    h1 = jnp.dot(xb, w1_ref[...], preferred_element_type=jnp.float32)
    h1 = jnp.maximum(h1 + b1_ref[...], 0.0)
    # dropout: identity in eval mode.
    o_ref[...] = _mlp_head(h1, w2_ref, b2_ref, w3t_ref, b3_ref)


def _make_ktiled_kernel(num_features, tk):
    """fc1 reduced over a K grid axis (only used when w1 is too large to keep resident)."""
    ragged = num_features % tk != 0

    def kernel(x_ref, w1_ref, b1_ref, w2_ref, b2_ref, w3t_ref, b3_ref,
               o_ref, acc_ref):
        k = pl.program_id(1)

        @pl.when(k == 0)
        def _():
            acc_ref[...] = jnp.zeros_like(acc_ref)

        xt = x_ref[...]
        if ragged:
            # x is NOT padded along K in HBM; zero the out-of-range tail columns of
            # the final K block (w1 is zero-padded there, so the tail contributes 0).
            col = k * tk + jax.lax.broadcasted_iota(jnp.int32, xt.shape, 1)
            xt = jnp.where(col < num_features, xt, 0.0)
        acc_ref[...] += jnp.dot(xt.astype(jnp.bfloat16), w1_ref[...],
                                preferred_element_type=jnp.float32)

        @pl.when(k == pl.num_programs(1) - 1)
        def _():
            h1 = jnp.maximum(acc_ref[...] + b1_ref[...], 0.0)
            o_ref[...] = _mlp_head(h1, w2_ref, b2_ref, w3t_ref, b3_ref)

    return kernel


# ---------------------------------------------------------------------------
# Planning + wrapper
# ---------------------------------------------------------------------------
def _plan(B, F, tb, tk, path):
    """Pick (path, TB, TK) so the VMEM working set stays well under budget."""
    cap = _vmem_capacity_bytes()
    budget = min(cap // 2, 40 << 20)       # generous headroom; v7x only has 64 MiB / TC
    B8 = _round_up(max(B, 1), 8)

    # Resident-w1 working set (the pipeline double-buffers every stream).
    w1_bytes = 2 * F * H1 * 2                                    # bf16, 2 buffers
    per_row = 2 * F * 4 + 2 * OUT_ROWS * 4 + (H1 + H2) * 8       # x + out + activations
    tb_cap = (budget - w1_bytes) // per_row if w1_bytes < budget else 0

    use_resident = path == "resident" or (path is None and (tb_cap >= 128 or B8 <= tb_cap))
    if use_resident:
        if B8 <= 256 and B8 <= min(tb, max(tb_cap, 8)):
            return "resident", B8, F                  # one small batch tile
        TB = max(128, min(tb, max(tb_cap, 128)) // 128 * 128)
        # Keep >= 2 batch tiles so the "parallel" axis can span both v7x TensorCores.
        TB = min(TB, _round_up(pl.cdiv(B8, 2), 128))
        return "resident", TB, F

    # K-tiled path: stream w1 in (TK, 128) slabs and accumulate fc1 in VMEM scratch.
    TK = min(_round_up(F, 128), tk)
    w1_slab = 2 * TK * H1 * 2
    per_row = 2 * TK * 4 + 2 * OUT_ROWS * 4 + H1 * 4 + (H1 + H2) * 8
    tb_cap = max(128, (budget - w1_slab) // per_row)
    TB = max(128, min(tb, tb_cap) // 128 * 128)
    TB = min(TB, max(128, _round_up(pl.cdiv(B8, 2), 128)))
    return "ktiled", TB, TK


def reference_forward(x, params):
    """Plain-XLA forward (also used as the small-problem fallback path)."""
    h1 = jnp.maximum(jnp.dot(x.astype(jnp.bfloat16), params["w1"],
                             preferred_element_type=jnp.float32) + params["b1"], 0.0)
    h2 = jnp.maximum(jnp.dot(h1.astype(jnp.bfloat16), params["w2"],
                             preferred_element_type=jnp.float32) + params["b2"], 0.0)
    z = jnp.dot(h2.astype(jnp.bfloat16), params["w3"],
                preferred_element_type=jnp.float32) + params["b3"]
    return jax.nn.sigmoid(z)


def text_classifier_forward(x, params, *, tb=512, tk=2048, path=None,
                            force_pallas=False):
    """Forward pass of TextClassifier.  x: [B, F] float32; returns [B, 1] float32."""
    w1, b1 = params["w1"], params["b1"]
    w2, b2 = params["w2"], params["b2"]
    w3, b3 = params["w3"], params["b3"]
    B, F = x.shape

    # Tiny problems: pallas_call fixed overhead dominates -- let XLA fuse the MLP.
    if not force_pallas and B * F < (1 << 18):
        return reference_forward(x, params)

    kind, TB, TK = _plan(B, F, tb, tk, path)
    n_b = pl.cdiv(_round_up(B, 8), TB)
    B_pad = n_b * TB

    # x keeps its stored dtype (no wrapper cast); pad only if B isn't a tile multiple.
    xp = x if B_pad == B else jnp.pad(x, ((0, B_pad - B), (0, 0)))

    # fc3 weight transposed and padded to 8 sublanes; bias as a (1, 1) broadcast tile.
    w3t = jnp.pad(jnp.transpose(w3), ((0, OUT_ROWS - w3.shape[1]), (0, 0)))
    b3r = jnp.reshape(b3, (1, 1))

    x_bytes = xp.dtype.itemsize
    small_w = 2 * (H1 * H2 * 2 + H1 * 4 + H2 * 4 + OUT_ROWS * H2 * 2 + 4)
    cap = _vmem_capacity_bytes()

    if kind == "resident":
        grid = (n_b,)
        in_specs = [
            pl.BlockSpec((TB, F), lambda i: (i, 0)),           # x batch tile
            pl.BlockSpec((F, H1), lambda i: (0, 0)),           # w1: VMEM-resident (DMA'd once)
            pl.BlockSpec((1, H1), lambda i: (0, 0)),           # b1
            pl.BlockSpec((H1, H2), lambda i: (0, 0)),          # w2
            pl.BlockSpec((1, H2), lambda i: (0, 0)),           # b2
            pl.BlockSpec((OUT_ROWS, H2), lambda i: (0, 0)),    # w3^T (8 rows)
            pl.BlockSpec((1, 1), lambda i: (0, 0)),            # b3
        ]
        out_spec = pl.BlockSpec((OUT_ROWS, TB), lambda i: (0, i))
        scratch = []
        kernel = _mlp_kernel_resident
        semantics = ("parallel",)
        w1_op = w1
        vmem_need = (2 * TB * F * x_bytes + 2 * F * H1 * 2
                     + 2 * OUT_ROWS * TB * 4 + small_w)
        w1_traffic = w1.size * 2                                # read once
        flop_k = F
    else:
        n_k = pl.cdiv(F, TK)
        F_pad = n_k * TK
        # Only w1 is padded along K (tiny); x's ragged K tail is masked in-kernel.
        w1_op = w1 if F_pad == F else jnp.pad(w1, ((0, F_pad - F), (0, 0)))
        grid = (n_b, n_k)
        in_specs = [
            pl.BlockSpec((TB, TK), lambda i, k: (i, k)),        # x tile
            pl.BlockSpec((TK, H1), lambda i, k: (k, 0)),        # w1 K-slab
            pl.BlockSpec((1, H1), lambda i, k: (0, 0)),         # b1
            pl.BlockSpec((H1, H2), lambda i, k: (0, 0)),        # w2
            pl.BlockSpec((1, H2), lambda i, k: (0, 0)),         # b2
            pl.BlockSpec((OUT_ROWS, H2), lambda i, k: (0, 0)),  # w3^T
            pl.BlockSpec((1, 1), lambda i, k: (0, 0)),          # b3
        ]
        out_spec = pl.BlockSpec((OUT_ROWS, TB), lambda i, k: (0, i))
        scratch = [pltpu.VMEM((TB, H1), jnp.float32)]           # fc1 accumulator
        kernel = _make_ktiled_kernel(F, TK)
        semantics = ("parallel", "arbitrary")
        vmem_need = (2 * TB * TK * x_bytes + 2 * TK * H1 * 2 + TB * H1 * 4
                     + 2 * OUT_ROWS * TB * 4 + small_w)
        w1_traffic = n_b * w1_op.size * 2                       # re-streamed per batch tile
        flop_k = F_pad

    vmem_limit = int(min(cap * 3 // 4, max(vmem_need + (16 << 20), 32 << 20)))
    cost = pl.CostEstimate(
        flops=2 * B_pad * (flop_k * H1 + H1 * H2 + H2 * OUT_ROWS),
        transcendentals=OUT_ROWS * B_pad,
        bytes_accessed=int(xp.size * x_bytes + w1_traffic + w2.size * 2 + w3t.size * 2
                           + b1.size * 4 + b2.size * 4 + 4 + OUT_ROWS * B_pad * 4),
    )

    out = pl.pallas_call(
        kernel,
        out_shape=jax.ShapeDtypeStruct((OUT_ROWS, B_pad), jnp.float32),
        grid_spec=pltpu.PrefetchScalarGridSpec(
            num_scalar_prefetch=0,
            grid=grid,
            in_specs=in_specs,
            out_specs=out_spec,
            scratch_shapes=scratch,
        ),
        compiler_params=pltpu.CompilerParams(
            dimension_semantics=semantics,
            vmem_limit_bytes=vmem_limit,
        ),
        cost_estimate=cost,
    )(xp, w1_op, b1, w2, b2, w3t, b3r)

    # Row 0 of the lane-dense slab holds the real logits; rows 1..7 are padding.
    return out[0, :B][:, None]


def init_params(key, num_features):
    """Init mimicking torch.nn.Linear (U[-1/sqrt(fan_in), +]); weights stored
    pre-transposed [in, out] and in bf16 (matmul inputs); biases f32."""
    def linear(k, fan_in, fan_out):
        kw, kb = jax.random.split(k)
        bound = 1.0 / (fan_in ** 0.5)
        w = jax.random.uniform(kw, (fan_in, fan_out), jnp.float32, -bound, bound)
        b = jax.random.uniform(kb, (1, fan_out), jnp.float32, -bound, bound)
        return w.astype(jnp.bfloat16), b

    k1, k2, k3 = jax.random.split(key, 3)
    w1, b1 = linear(k1, num_features, H1)
    w2, b2 = linear(k2, H1, H2)
    w3, b3 = linear(k3, H2, 1)
    return {"w1": w1, "b1": b1, "w2": w2, "b2": b2, "w3": w3, "b3": b3}


if __name__ == "__main__":
    key = jax.random.PRNGKey(0)
    k_x1, k_x2, k_p1, k_p2 = jax.random.split(key, 4)

    # Test 1: small shapes (resident-w1 path, single batch tile).
    B1, F1 = 16, 32
    x1 = jax.random.normal(k_x1, (B1, F1), jnp.float32)
    p1 = init_params(k_p1, F1)
    out1 = jax.block_until_ready(text_classifier_forward(x1, p1, force_pallas=True))
    ref1 = reference_forward(x1, p1)
    assert out1.shape == (B1, 1), out1.shape
    assert jnp.allclose(out1, ref1, atol=2e-3, rtol=2e-3)

    # Test 2: multi-tile resident path (batch padding + lane-dense output repack)
    # and the K-tiled path (ragged num_features tail masked in-kernel).
    B2, F2 = 272, 320
    x2 = jax.random.normal(k_x2, (B2, F2), jnp.float32)
    p2 = init_params(k_p2, F2)
    ref2 = reference_forward(x2, p2)
    out2a = jax.block_until_ready(
        text_classifier_forward(x2, p2, tb=128, path="resident", force_pallas=True))
    out2b = jax.block_until_ready(
        text_classifier_forward(x2, p2, tb=128, tk=128, path="ktiled", force_pallas=True))
    assert out2a.shape == (B2, 1) and out2b.shape == (B2, 1)
    assert jnp.allclose(out2a, ref2, atol=2e-3, rtol=2e-3)
    assert jnp.allclose(out2b, ref2, atol=2e-3, rtol=2e-3)

    print("KERNEL_OK")
</pallas_src>

<mosaic_0001>
module attributes {stable_mosaic.version = 11 : i64} {
  func.func @_mlp_kernel_resident(%arg0: i32, %arg1: memref<16x32xf32, #tpu.memory_space<vmem>>, %arg2: memref<32x128xbf16, #tpu.memory_space<vmem>>, %arg3: memref<1x128xf32, #tpu.memory_space<vmem>>, %arg4: memref<128x64xbf16, #tpu.memory_space<vmem>>, %arg5: memref<1x64xf32, #tpu.memory_space<vmem>>, %arg6: memref<8x64xbf16, #tpu.memory_space<vmem>>, %arg7: memref<1x1xf32, #tpu.memory_space<vmem>>, %arg8: memref<8x16xf32, #tpu.memory_space<vmem>>) attributes {dimension_semantics = [#tpu.dimension_semantics<parallel>], iteration_bounds = array<i64: 1>, scalar_prefetch = 0 : i64, scratch_operands = 0 : i64, tpu.core_type = #tpu.core_type<tc>, window_params = [{transform_indices = @transform_0, window_bounds = array<i64: 16, 32>}, {pipeline_mode = #tpu.pipeline_mode<synchronous>, transform_indices = @transform_1, window_bounds = array<i64: 32, 128>}, {pipeline_mode = #tpu.pipeline_mode<synchronous>, transform_indices = @transform_2, window_bounds = array<i64: 1, 128>}, {pipeline_mode = #tpu.pipeline_mode<synchronous>, transform_indices = @transform_3, window_bounds = array<i64: 128, 64>}, {pipeline_mode = #tpu.pipeline_mode<synchronous>, transform_indices = @transform_4, window_bounds = array<i64: 1, 64>}, {pipeline_mode = #tpu.pipeline_mode<synchronous>, transform_indices = @transform_5, window_bounds = array<i64: 8, 64>}, {pipeline_mode = #tpu.pipeline_mode<synchronous>, transform_indices = @transform_6, window_bounds = array<i64: 1, 1>}, {transform_indices = @transform_7, window_bounds = array<i64: 8, 16>}]} {
    %c0 = arith.constant 0 : index
    %c0_0 = arith.constant 0 : index
    %0 = vector.load %arg1[%c0, %c0_0] : memref<16x32xf32, #tpu.memory_space<vmem>>, vector<16x32xf32>
    %1 = arith.truncf %0 : vector<16x32xf32> to vector<16x32xbf16>
    %c0_1 = arith.constant 0 : index
    %c0_2 = arith.constant 0 : index
    %2 = vector.load %arg2[%c0_1, %c0_2] : memref<32x128xbf16, #tpu.memory_space<vmem>>, vector<32x128xbf16>
    %cst = arith.constant dense<0.000000e+00> : vector<16x128xf32>
    %3 = tpu.matmul %1, %2, %cst {dimension_numbers = #tpu.dot_dimension_numbers<[1], [0], [0], [1], [0, 0, 1, 1], [], []>} : vector<16x32xbf16>, vector<32x128xbf16>, vector<16x128xf32> -> vector<16x128xf32>
    %c0_3 = arith.constant 0 : index
    %c0_4 = arith.constant 0 : index
    %4 = vector.load %arg3[%c0_3, %c0_4] : memref<1x128xf32, #tpu.memory_space<vmem>>, vector<1x128xf32>
    %5 = vector.broadcast %4 : vector<1x128xf32> to vector<16x128xf32>
    %6 = arith.addf %3, %5 : vector<16x128xf32>
    %cst_5 = arith.constant 0.000000e+00 : f32
    %7 = vector.broadcast %cst_5 : f32 to vector<16x128xf32>
    %8 = arith.maximumf %6, %7 : vector<16x128xf32>
    %9 = arith.truncf %8 : vector<16x128xf32> to vector<16x128xbf16>
    %c0_6 = arith.constant 0 : index
    %c0_7 = arith.constant 0 : index
    %10 = vector.load %arg4[%c0_6, %c0_7] : memref<128x64xbf16, #tpu.memory_space<vmem>>, vector<128x64xbf16>
    %cst_8 = arith.constant dense<0.000000e+00> : vector<16x64xf32>
    %11 = tpu.matmul %9, %10, %cst_8 {dimension_numbers = #tpu.dot_dimension_numbers<[1], [0], [0], [1], [0, 0, 1, 1], [], []>} : vector<16x128xbf16>, vector<128x64xbf16>, vector<16x64xf32> -> vector<16x64xf32>
    %c0_9 = arith.constant 0 : index
    %c0_10 = arith.constant 0 : index
    %12 = vector.load %arg5[%c0_9, %c0_10] : memref<1x64xf32, #tpu.memory_space<vmem>>, vector<1x64xf32>
    %13 = vector.broadcast %12 : vector<1x64xf32> to vector<16x64xf32>
    %14 = arith.addf %11, %13 : vector<16x64xf32>
    %cst_11 = arith.constant 0.000000e+00 : f32
    %15 = vector.broadcast %cst_11 : f32 to vector<16x64xf32>
    %16 = arith.maximumf %14, %15 : vector<16x64xf32>
    %c0_12 = arith.constant 0 : index
    %c0_13 = arith.constant 0 : index
    %17 = vector.load %arg6[%c0_12, %c0_13] : memref<8x64xbf16, #tpu.memory_space<vmem>>, vector<8x64xbf16>
    %18 = arith.truncf %16 : vector<16x64xf32> to vector<16x64xbf16>
    %cst_14 = arith.constant dense<0.000000e+00> : vector<8x16xf32>
    %19 = tpu.matmul %17, %18, %cst_14 {dimension_numbers = #tpu.dot_dimension_numbers<[1], [1], [0], [0], [0, 0, 1, 0], [], []>} : vector<8x64xbf16>, vector<16x64xbf16>, vector<8x16xf32> -> vector<8x16xf32>
    %c0_15 = arith.constant 0 : index
    %c0_16 = arith.constant 0 : index
    %20 = vector.load %arg7[%c0_15, %c0_16] : memref<1x1xf32, #tpu.memory_space<vmem>>, vector<1x1xf32>
    %21 = vector.broadcast %20 : vector<1x1xf32> to vector<8x16xf32>
    %22 = arith.addf %19, %21 : vector<8x16xf32>
    %cst_17 = arith.constant 0.000000e+00 : f32
    %23 = vector.broadcast %cst_17 : f32 to vector<8x16xf32>
    %24 = arith.subf %23, %22 : vector<8x16xf32>
    %25 = math.exp %24 : vector<8x16xf32>
    %cst_18 = arith.constant 1.000000e+00 : f32
    %26 = vector.broadcast %cst_18 : f32 to vector<8x16xf32>
    %27 = arith.addf %26, %25 : vector<8x16xf32>
    %cst_19 = arith.constant 1.000000e+00 : f32
    %28 = vector.broadcast %cst_19 : f32 to vector<8x16xf32>
    %29 = arith.divf %28, %27 : vector<8x16xf32>
    %c0_20 = arith.constant 0 : index
    %c0_21 = arith.constant 0 : index
    %30 = vector.load %arg8[%c0_20, %c0_21] : memref<8x16xf32, #tpu.memory_space<vmem>>, vector<8x16xf32>
    tpu.vector_store %arg8[%c0_20, %c0_21], %29 {strides = array<i32>} : memref<8x16xf32, #tpu.memory_space<vmem>>, vector<8x16xf32>,
    return
  }
  func.func @transform_0(%arg0: i32) -> (i32, i32) {
    %c0_i32 = arith.constant 0 : i32
    %c0_i32_0 = arith.constant 0 : i32
    return %arg0, %c0_i32 : i32, i32
  }
  func.func @transform_1(%arg0: i32) -> (i32, i32) {
    %c0_i32 = arith.constant 0 : i32
    %c0_i32_0 = arith.constant 0 : i32
    %c0_i32_1 = arith.constant 0 : i32
    return %c0_i32, %c0_i32_0 : i32, i32
  }
  func.func @transform_2(%arg0: i32) -> (i32, i32) {
    %c0_i32 = arith.constant 0 : i32
    %c0_i32_0 = arith.constant 0 : i32
    %c0_i32_1 = arith.constant 0 : i32
    return %c0_i32, %c0_i32_0 : i32, i32
  }
  func.func @transform_3(%arg0: i32) -> (i32, i32) {
    %c0_i32 = arith.constant 0 : i32
    %c0_i32_0 = arith.constant 0 : i32
    %c0_i32_1 = arith.constant 0 : i32
    return %c0_i32, %c0_i32_0 : i32, i32
  }
  func.func @transform_4(%arg0: i32) -> (i32, i32) {
    %c0_i32 = arith.constant 0 : i32
    %c0_i32_0 = arith.constant 0 : i32
    %c0_i32_1 = arith.constant 0 : i32
    return %c0_i32, %c0_i32_0 : i32, i32
  }
  func.func @transform_5(%arg0: i32) -> (i32, i32) {
    %c0_i32 = arith.constant 0 : i32
    %c0_i32_0 = arith.constant 0 : i32
    %c0_i32_1 = arith.constant 0 : i32
    return %c0_i32, %c0_i32_0 : i32, i32
  }
  func.func @transform_6(%arg0: i32) -> (i32, i32) {
    %c0_i32 = arith.constant 0 : i32
    %c0_i32_0 = arith.constant 0 : i32
    %c0_i32_1 = arith.constant 0 : i32
    return %c0_i32, %c0_i32_0 : i32, i32
  }
  func.func @transform_7(%arg0: i32) -> (i32, i32) {
    %c0_i32 = arith.constant 0 : i32
    %c0_i32_0 = arith.constant 0 : i32
    return %c0_i32, %arg0 : i32, i32
  }
}

</mosaic_0001>

<llo_original>
// kernel: tpu_custom_call.1
$region0: #{tpu_custom_call.1}
  #allocation0 [shape = 'u32[]', space=smem, size = 0x4, offset = 0x4, fixed_abs, tag = 'smem constant byte address 0x4 - core index']
  #allocation1 [shape = 'u32[144,128]{1,0:T(1,128)}', space=vmem, size = 0x12000, scoped, tag = 'internal scratch']
  #allocation2 [shape = 'f32[1,1]{1,0:T(1,128)S(1)}', space=vmem, size = 0x200, scoped, tag = 'scoped memory for tpu_custom_call.1']
  %s0 = inlined_call_operand.vmem [shape: f32[16,32], index: 0, kind: input, shape index: {}]
  %s1 = inlined_call_operand.vmem [shape: bf16[32,128], index: 1, kind: input, shape index: {}]
  %s2 = inlined_call_operand.vmem [shape: f32[1,128], index: 2, kind: input, shape index: {}]
  %s3 = inlined_call_operand.vmem [shape: bf16[128,64], index: 3, kind: input, shape index: {}]
  %s4 = inlined_call_operand.vmem [shape: f32[1,64], index: 4, kind: input, shape index: {}]
  %s5 = inlined_call_operand.vmem [shape: bf16[8,64], index: 5, kind: input, shape index: {}]
  %s6 = inlined_call_operand.<no memory space> [shape: f32[1,1], index: 6, kind: input, shape index: {}]
  %s7 = inlined_call_operand.hbm [shape: f32[8,16], index: 7, kind: output, shape index: {}]
  %s8 = sld [smem:[#allocation0]]
  $region38: #{tpu_custom_call.1} parent=0
    _
  %s10 = ssub.s32 1, %s8
  %s11 = scalar_select 0, %s10, %s8
  %v12 = vstv %s6
  %13 = vst [vmem:[#allocation2] sm:$0x1] %v12
  $region1: #{tpu_custom_call.1} parent=0
    #allocation3 [shape = 'u8[4096]{0}', space=vmem, size = 0x1000, scoped, tag = 'output window, operand 0, single buffered']
    #allocation4 [shape = 's32[1]{0}', space=sflag, size = 0x4, scoped, tag = 'scoped memory for tpu_custom_call.1']
    %14 = vsyncpa [#allocation4], 0
    // Predicated region
    $region2: #{tpu_custom_call.1} parent=1 // pred_check
      _
    $region3: #{tpu_custom_call.1} parent=1 // pred_check_branch
      %16 = sbr.rel (0) target = $region5
    $region4: #{tpu_custom_call.1} parent=1 // pred_region
      _
    $region5: #{tpu_custom_call.1} parent=1 // pred_fallthru
      _
    // Predicated region
    $region6: #{tpu_custom_call.1} parent=1 // pred_check
      _
    $region7: #{tpu_custom_call.1} parent=1 // pred_check_branch
      %18 = sbr.rel (0) target = $region9
    $region8: #{tpu_custom_call.1} parent=1 // pred_region
      _
    $region9: #{tpu_custom_call.1} parent=1 // pred_fallthru
      _
    // Predicated region
    $region10: #{tpu_custom_call.1} parent=1 // pred_check
      _
    $region11: #{tpu_custom_call.1} parent=1 // pred_check_branch
      %20 = sbr.rel (0) target = $region13
    $region12: #{tpu_custom_call.1} parent=1 // pred_region
      _
    $region13: #{tpu_custom_call.1} parent=1 // pred_fallthru
      _
    // Predicated region
    $region14: #{tpu_custom_call.1} parent=1 // pred_check
      _
    $region15: #{tpu_custom_call.1} parent=1 // pred_check_branch
      %22 = sbr.rel (0) target = $region17
    $region16: #{tpu_custom_call.1} parent=1 // pred_region
      _
    $region17: #{tpu_custom_call.1} parent=1 // pred_fallthru
      _
    // Predicated region
    $region18: #{tpu_custom_call.1} parent=1 // pred_check
      _
    $region19: #{tpu_custom_call.1} parent=1 // pred_check_branch
      %24 = sbr.rel (0) target = $region21
    $region20: #{tpu_custom_call.1} parent=1 // pred_region
      _
    $region21: #{tpu_custom_call.1} parent=1 // pred_fallthru
      _
    // Predicated region
    $region22: #{tpu_custom_call.1} parent=1 // pred_check
      _
    $region23: #{tpu_custom_call.1} parent=1 // pred_check_branch
      %26 = sbr.rel (0) target = $region25
    $region24: #{tpu_custom_call.1} parent=1 // pred_region
      _
    $region25: #{tpu_custom_call.1} parent=1 // pred_fallthru
      _
    // Predicated region
    $region26: #{tpu_custom_call.1} parent=1 // pred_check
      _
    $region27: #{tpu_custom_call.1} parent=1 // pred_check_branch
      %28 = sbr.rel (0) target = $region29
    $region28: #{tpu_custom_call.1} parent=1 // pred_region
      _
    $region29: #{tpu_custom_call.1} parent=1 // pred_fallthru
      _
    %v30 = vld [vmem:[%s0] sm:$0xff]
    %v31 = vld [vmem:[%s0 + $0x8] sm:$0xff]
    %v32 = vpack.c.bf16 %v31, %v30
    %v33 = vld [vmem:[%s1] sm:$0xf]
    %v34 = vld [vmem:[%s1 + $0x4] sm:$0xf]
    %v35 = vld [vmem:[%s1 + $0x8] sm:$0xf]
    %v36 = vld [vmem:[%s1 + $0xc] sm:$0xf]
    %v37 = vld [vmem:[%s2] sm:$0x1]
    %v39 = vlaneseq
    %v40 = vshrl.u32 %v39, 7
    %v41 = vsub.s32 0, %v40
    %v42 = vrot.slane %v37, %v41
    %v48 = vunpack.c.l.b16 %v33
    %v49 = vunpack.c.l.b16 %v34
    %v50 = vunpack.c.l.b16 %v35
    %v51 = vunpack.c.l.b16 %v36
    %v52 = vpack.c.b16 %v49, %v48
    %v53 = vpack.c.b16 %v51, %v50
    %vm56 = vcmask 261120
    %v58 = vsel %vm56, %v32, 0
    %60 = vmatprep.subr.bf16.mxu0 0
    %61 = vmatpush1.bf16.msra.mxu0 %v52
    %62 = vmatprep.subr.bf16.mxu0 0
    %63 = vmatpush1.bf16.msra.mxu0 %v53
    %64 = vmatprep.subr.bf16.mxu0 0
    %65 = vmatpush1.bf16.msra.mxu0 0
    %66 = vmatprep.subr.bf16.mxu0 0
    %67 = vmatpush1.bf16.msra.mxu0 0
    %68 = vmatprep.subr.bf16.mxu0 0
    %69 = vmatpush1.bf16.msra.mxu0 0
    %70 = vmatprep.subr.bf16.mxu0 0
    %71 = vmatpush1.bf16.msra.mxu0 0
    %72 = vmatprep.subr.bf16.mxu0 0
    %73 = vmatpush1.bf16.msra.mxu0 0
    %74 = vmatprep.subr.bf16.mxu0 0
    %75 = vmatpush1.bf16.msra.mxu0 0
    %76 = vmatprep.subr.bf16.mxu0 0
    %77 = vmatpush1.bf16.msra.mxu0 0
    %78 = vmatprep.subr.bf16.mxu0 0
    %79 = vmatpush1.bf16.msra.mxu0 0
    %80 = vmatprep.subr.bf16.mxu0 0
    %81 = vmatpush1.bf16.msra.mxu0 0
    %82 = vmatprep.subr.bf16.mxu0 0
    %83 = vmatpush1.bf16.msra.mxu0 0
    %84 = vmatprep.subr.bf16.mxu0 0
    %85 = vmatpush1.bf16.msra.mxu0 0
    %86 = vmatprep.subr.bf16.mxu0 0
    %87 = vmatpush1.bf16.msra.mxu0 0
    %88 = vmatprep.subr.bf16.mxu0 0
    %89 = vmatpush1.bf16.msra.mxu0 0
    %90 = vmatprep.subr.bf16.mxu0 0
    %91 = vmatpush1.bf16.msra.mxu0 0
    %92 = vmatprep.mubr.bf16.mxu0 0
    %93 = vmatmul.mubr.bf16.gmra.mrb[0].mxu0 %v58
    %v94 = vpop.f32.mrb[0].mxu0
    %v95 = vadd.f32 %v42, %v94
    %v96 = vpop.f32.mrb[0].mxu0
    %v97 = vpop.f32.mrb[0].mxu0
    %v98 = vadd.f32 %v42, %v97
    %v99 = vpop.f32.mrb[0].mxu0
    %100 = vdwg.mxu0
    %v101 = vmax.f32 %v95, 0.0
    %v102 = vmax.f32 %v98, 0.0
    %v103 = vpack.c.bf16 %v102, %v101
    %v104 = vld [vmem:[%s3] sm:$0xf]
    %v105 = vld [vmem:[%s3 + $0x4] sm:$0xf]
    %v106 = vld [vmem:[%s3 + $0x8] sm:$0xf]
    %v107 = vld [vmem:[%s3 + $0xc] sm:$0xf]
    %v108 = vld [vmem:[%s3 + $0x10] sm:$0xf]
    %v109 = vld [vmem:[%s3 + $0x14] sm:$0xf]
    %v110 = vld [vmem:[%s3 + $0x18] sm:$0xf]
    %v111 = vld [vmem:[%s3 + $0x1c] sm:$0xf]
    %v112 = vld [vmem:[%s3 + $0x20] sm:$0xf]
    %v113 = vld [vmem:[%s3 + $0x24] sm:$0xf]
    %v114 = vld [vmem:[%s3 + $0x28] sm:$0xf]
    %v115 = vld [vmem:[%s3 + $0x2c] sm:$0xf]
    %v116 = vld [vmem:[%s3 + $0x30] sm:$0xf]
    %v117 = vld [vmem:[%s3 + $0x34] sm:$0xf]
    %v118 = vld [vmem:[%s3 + $0x38] sm:$0xf]
    %v119 = vld [vmem:[%s3 + $0x3c] sm:$0xf]
    %v120 = vld [vmem:[%s4] sm:$0x1]
    %v122 = vlaneseq
    %v123 = vshrl.u32 %v122, 7
    %v124 = vsub.s32 0, %v123
    %v125 = vrot.slane %v120, %v124
    %v143 = vunpack.c.l.b16 %v104
    %v144 = vunpack.c.l.b16 %v105
    %v145 = vunpack.c.l.b16 %v106
    %v146 = vunpack.c.l.b16 %v107
    %v147 = vunpack.c.l.b16 %v108
    %v148 = vunpack.c.l.b16 %v109
    %v149 = vunpack.c.l.b16 %v110
    %v150 = vunpack.c.l.b16 %v111
    %v151 = vunpack.c.l.b16 %v112
    %v152 = vunpack.c.l.b16 %v113
    %v153 = vunpack.c.l.b16 %v114
    %v154 = vunpack.c.l.b16 %v115
    %v155 = vunpack.c.l.b16 %v116
    %v156 = vunpack.c.l.b16 %v117
    %v157 = vunpack.c.l.b16 %v118
    %v158 = vunpack.c.l.b16 %v119
    %v159 = vpack.c.b16 %v144, %v143
    %v160 = vpack.c.b16 %v146, %v145
    %v161 = vpack.c.b16 %v148, %v147
    %v162 = vpack.c.b16 %v150, %v149
    %v163 = vpack.c.b16 %v152, %v151
    %v164 = vpack.c.b16 %v154, %v153
    %v165 = vpack.c.b16 %v156, %v155
    %v166 = vpack.c.b16 %v158, %v157
    %175 = vmatprep.subr.bf16.mxu0 0
    %176 = vmatpush1.bf16.msra.mxu0 %v159
    %177 = vmatprep.subr.bf16.mxu0 0
    %178 = vmatpush1.bf16.msra.mxu0 %v160
    %179 = vmatprep.subr.bf16.mxu0 0
    %180 = vmatpush1.bf16.msra.mxu0 %v161
    %181 = vmatprep.subr.bf16.mxu0 0
    %182 = vmatpush1.bf16.msra.mxu0 %v162
    %183 = vmatprep.subr.bf16.mxu0 0
    %184 = vmatpush1.bf16.msra.mxu0 %v163
    %185 = vmatprep.subr.bf16.mxu0 0
    %186 = vmatpush1.bf16.msra.mxu0 %v164
    %187 = vmatprep.subr.bf16.mxu0 0
    %188 = vmatpush1.bf16.msra.mxu0 %v165
    %189 = vmatprep.subr.bf16.mxu0 0
    %190 = vmatpush1.bf16.msra.mxu0 %v166
    %191 = vmatprep.subr.bf16.mxu0 0
    %192 = vmatpush1.bf16.msra.mxu0 0
    %193 = vmatprep.subr.bf16.mxu0 0
    %194 = vmatpush1.bf16.msra.mxu0 0
    %195 = vmatprep.subr.bf16.mxu0 0
    %196 = vmatpush1.bf16.msra.mxu0 0
    %197 = vmatprep.subr.bf16.mxu0 0
    %198 = vmatpush1.bf16.msra.mxu0 0
    %199 = vmatprep.subr.bf16.mxu0 0
    %200 = vmatpush1.bf16.msra.mxu0 0
    %201 = vmatprep.subr.bf16.mxu0 0
    %202 = vmatpush1.bf16.msra.mxu0 0
    %203 = vmatprep.subr.bf16.mxu0 0
    %204 = vmatpush1.bf16.msra.mxu0 0
    %205 = vmatprep.subr.bf16.mxu0 0
    %206 = vmatpush1.bf16.msra.mxu0 0
    %207 = vmatprep.mubr.bf16.mxu0 0
    %208 = vmatmul.mubr.bf16.gmra.mrb[0].mxu0 %v103
    %v209 = vpop.f32.mrb[0].mxu0
    %v210 = vadd.f32 %v125, %v209
    %v211 = vpop.f32.mrb[0].mxu0
    %v212 = vpop.f32.mrb[0].mxu0
    %v213 = vadd.f32 %v125, %v212
    %v214 = vpop.f32.mrb[0].mxu0
    %215 = vdwg.mxu0
    %v216 = vmax.f32 %v210, 0.0
    %v217 = vmax.f32 %v213, 0.0
    %v218 = vld [vmem:[%s5] sm:$0xf]
    %v219 = vpack.c.bf16 %v217, %v216
    %v220 = vld [vmem:[#allocation2] sm:$0x1]
    %v222 = vlaneseq
    %v223 = vshrl.u32 %v222, 7
    %v224 = vsub.s32 0, %v223
    %v225 = vrot.slane %v220, %v224
    %226 = vset.pattern.permute.xlu0 0
    %227 = vperm.xlu0 %226, %v225
    %v228 = vpop.permute.xlu0 %227
    %vm230 = vcmask 523264
    %v232 = vsel %vm230, %v218, 0
    %v235 = vsel %vm230, %v219, 0
    %237 = vmatprep.subr.bf16.mxu0 0
    %238 = vmatpush1.bf16.xpose.msra.mxu0 %v235
    %239 = vmatprep.subr.bf16.mxu0 0
    %240 = vmatpush1.bf16.xpose.msra.mxu0 0
    %241 = vmatprep.subr.bf16.mxu0 0
    %242 = vmatpush1.bf16.xpose.msra.mxu0 0
    %243 = vmatprep.subr.bf16.mxu0 0
    %244 = vmatpush1.bf16.xpose.msra.mxu0 0
    %245 = vmatprep.subr.bf16.mxu0 0
    %246 = vmatpush1.bf16.xpose.msra.mxu0 0
    %247 = vmatprep.subr.bf16.mxu0 0
    %248 = vmatpush1.bf16.xpose.msra.mxu0 0
    %249 = vmatprep.subr.bf16.mxu0 0
    %250 = vmatpush1.bf16.xpose.msra.mxu0 0
    %251 = vmatprep.subr.bf16.mxu0 0
    %252 = vmatpush1.bf16.xpose.msra.mxu0 0
    %253 = vmatprep.subr.bf16.mxu0 0
    %254 = vmatpush1.bf16.xpose.msra.mxu0 0
    %255 = vmatprep.subr.bf16.mxu0 0
    %256 = vmatpush1.bf16.xpose.msra.mxu0 0
    %257 = vmatprep.subr.bf16.mxu0 0
    %258 = vmatpush1.bf16.xpose.msra.mxu0 0
    %259 = vmatprep.subr.bf16.mxu0 0
    %260 = vmatpush1.bf16.xpose.msra.mxu0 0
    %261 = vmatprep.subr.bf16.mxu0 0
    %262 = vmatpush1.bf16.xpose.msra.mxu0 0
    %263 = vmatprep.subr.bf16.mxu0 0
    %264 = vmatpush1.bf16.xpose.msra.mxu0 0
    %265 = vmatprep.subr.bf16.mxu0 0
    %266 = vmatpush1.bf16.xpose.msra.mxu0 0
    %267 = vmatprep.subr.bf16.mxu0 0
    %268 = vmatpush1.bf16.xpose.msra.mxu0 0
    %269 = vmatprep.mubr.bf16.mxu0 0
    %270 = vmatmul.mubr.bf16.gmra.mrb[0].mxu0 %v232
    %v271 = vpop.f32.mrb[0].mxu0
    %v272 = vadd.f32 %v228, %v271
    %v273 = vpop.f32.mrb[0].mxu0
    %v274 = vpop.f32.mrb[0].mxu0
    %v275 = vpop.f32.mrb[0].mxu0
    %276 = vdwg.mxu0
    %v277 = vsub.f32 0.0, %v272
    %v278 = vmul.f32 %v277, 1.442695
    %v279 = vpow.pop %v278
    %v280 = vadd.f32 %v279, 1.0
    %v281 = vrcp.pop %v280
    %v282 = vmul.f32 1.0, %v281
    %vm283 = vcmask 130048
    %284 = vst.msk [vmem:[#allocation3] sm:$0xff] %vm283, %v282
    // Predicated region
    $region30: #{tpu_custom_call.1} parent=1 // pred_check
      _
    $region31: #{tpu_custom_call.1} parent=1 // pred_check_branch
      %286 = sbr.rel (0) target = $region33
    $region32: #{tpu_custom_call.1} parent=1 // pred_region
      %s288 = ssub.s32 128, 128
      %289 = vsyncadd [#allocation4], %s288
      %s291 = sshll.u32 [#allocation3], 4
      %s292 = int_to_ptr.vmem [resolvable:$true] %s291
      %294 = dma.vmem_to_hbm [thread:$0]  %s292, 128, %s7, [#allocation4]
    $region33: #{tpu_custom_call.1} parent=1 // pred_fallthru
      _
    // Predicated region
    $region34: #{tpu_custom_call.1} parent=1 // pred_check
      _
    $region35: #{tpu_custom_call.1} parent=1 // pred_check_branch
      %296 = sbr.rel (0) target = $region37
    $region36: #{tpu_custom_call.1} parent=1 // pred_region
      %297 = dma.done [#allocation4], 128
    $region37: #{tpu_custom_call.1} parent=1 // pred_fallthru
      _
    %298 = vsyncpa [#allocation4], 1

</llo_original>
